<compile_context>
chip_gen: v7x
topology: tpu7x:2x2x1
jax: 0.10.0
libtpu: 0.0.40
codegen_flags: <defaults>
</compile_context>

<pallas_src>
import math

import jax
import jax.numpy as jnp
from jax.experimental import pallas as pl
from jax.experimental.pallas import tpu as pltpu


def _mlp_kernel(x_ref, w1_ref, w2_ref, w3_ref, b1_ref, b2_ref, b3_ref, o_ref):
    """Fused 3-layer MLP, computed in transposed (feature-major) space.

    x_ref : (tile_b, d_in)  VMEM  input tile (row-major -> contiguous HBM DMA)
    w1_ref: (n1, d_in)      VMEM  fc1 weight, PyTorch (out, in) layout
    w2_ref: (n2, n1)        SMEM  fc2 weight (read as scalars)
    w3_ref: (n_out, n2)     SMEM  fc3 weight (read as scalars)
    b*_ref:                 SMEM  biases (scalars)
    o_ref : (n_out, tile_b) VMEM  lane-dense output (batch on the lane axis)
    """
    n1 = w1_ref.shape[0]
    n2 = w2_ref.shape[0]
    n_out = w3_ref.shape[0]

    # fc1 on the MXU, contracting d_in of both operands so the result is
    # already transposed: h1t[k, b] = sum_d w1[k, d] * x[b, d].
    h1t = jax.lax.dot_general(
        w1_ref[...], x_ref[...],
        dimension_numbers=(((1,), (1,)), ((), ())),
        preferred_element_type=jnp.float32,
    )  # (n1, tile_b): batch is lane-dense from here on.

    # fc1 bias + fc2(tanh) + fc3(sigmoid) on the VPU with SMEM scalar
    # broadcasts; the 2/4-wide contractions would use <2% of the MXU.
    h1_rows = [h1t[k:k + 1, :] + b1_ref[k] for k in range(n1)]

    h2_rows = []
    for j in range(n2):
        s = h1_rows[0] * w2_ref[j, 0]
        for k in range(1, n1):
            s = s + h1_rows[k] * w2_ref[j, k]
        h2_rows.append(jnp.tanh(s + b2_ref[j]))

    out_rows = []
    for j in range(n_out):
        s = h2_rows[0] * w3_ref[j, 0]
        for k in range(1, n2):
            s = s + h2_rows[k] * w3_ref[j, k]
        out_rows.append(jax.nn.sigmoid(s + b3_ref[j]))

    # Single lane-dense store of the (n_out, tile_b) tile.
    o_ref[...] = jnp.concatenate(out_rows, axis=0).astype(o_ref.dtype)


def _choose_tile_b(batch, d_in, *, target_tile=1024,
                   x_vmem_budget_bytes=12 * 1024 * 1024):
    """Pick the batch tile (rows per grid step) under a generation-safe VMEM budget."""
    if batch <= 128:
        # Single sublane-aligned tile; grid of 1.
        return max(8, pl.cdiv(batch, 8) * 8)
    # Largest lane-aligned tile allowed by the double-buffered x budget.
    max_by_vmem = max(128, (x_vmem_budget_bytes // (2 * d_in * 4)) // 128 * 128)
    # Multiple of 128 (lane-dense output stores) and <= batch//2 so the
    # "parallel" grid axis has >= 2 steps for v7x's two TensorCores.
    tile = max(128, min(target_tile, max_by_vmem, (batch // 2) // 128 * 128))
    # Re-balance to the smallest lane-aligned tile that keeps the same number
    # of grid steps (minimizes padded rows).
    n_tiles = pl.cdiv(batch, tile)
    return pl.cdiv(pl.cdiv(batch, n_tiles), 128) * 128


def net_forward(x, params, *, tile_b=None):
    """Run the fused 3-layer MLP forward pass with a Pallas TPU kernel.

    x: (B, input_dimension) float32.
    params: w1 (2, d_in), b1 (2,), w2 (H, 2), b2 (H,), w3 (d_out, H), b3 (d_out,)
            -- PyTorch (out_features, in_features) layout.
    Returns (B, d_out) float32.
    """
    w1, b1 = params["w1"], params["b1"]
    w2, b2 = params["w2"], params["b2"]
    w3, b3 = params["w3"], params["b3"]

    B, d_in = x.shape
    n1 = w1.shape[0]
    n_out = w3.shape[0]

    if tile_b is None:
        tile_b = _choose_tile_b(B, d_in)

    # Pad the batch to a tile multiple; padded rows are sliced off below.
    grid_b = pl.cdiv(B, tile_b)
    b_pad = grid_b * tile_b
    if b_pad != B:
        x = jnp.pad(x, ((0, b_pad - B), (0, 0)))

    smem_spec = pl.BlockSpec(memory_space=pltpu.MemorySpace.SMEM)

    out_t = pl.pallas_call(
        _mlp_kernel,
        out_shape=jax.ShapeDtypeStruct((n_out, b_pad), jnp.float32),
        grid_spec=pltpu.PrefetchScalarGridSpec(
            num_scalar_prefetch=0,
            grid=(grid_b,),
            in_specs=[
                pl.BlockSpec((tile_b, d_in), lambda i: (i, 0)),  # x tile (contiguous DMA)
                pl.BlockSpec((n1, d_in), lambda i: (0, 0)),      # w1 (VMEM, constant block)
                smem_spec,  # w2
                smem_spec,  # w3
                smem_spec,  # b1
                smem_spec,  # b2
                smem_spec,  # b3
            ],
            out_specs=pl.BlockSpec((n_out, tile_b), lambda i: (0, i)),
        ),
        compiler_params=pltpu.CompilerParams(
            dimension_semantics=("parallel",),
            vmem_limit_bytes=32 * 1024 * 1024,
        ),
    )(x, w1, w2, w3, b1, b2, b3)

    # (n_out, b_pad) -> (B, n_out); transpose is over the tiny output only.
    return out_t.T[:B]


def init_params(key, input_dimension, multi_task=True):
    """Parameter init mirroring the PyTorch module.

    Weights: Xavier-normal (torch.nn.init.xavier_normal_), PyTorch (out, in) layout.
    Biases: uniform(-1/sqrt(fan_in), 1/sqrt(fan_in)) like nn.Linear default.
    """
    if multi_task:
        nodes_second, output_dimension = 4, 2
    else:
        nodes_second, output_dimension = 2, 1

    dims = [(input_dimension, 2), (2, nodes_second), (nodes_second, output_dimension)]
    keys = jax.random.split(key, 2 * len(dims))
    params = {}
    for idx, (fan_in, fan_out) in enumerate(dims):
        wk, bk = keys[2 * idx], keys[2 * idx + 1]
        std = math.sqrt(2.0 / (fan_in + fan_out))  # xavier_normal, gain=1
        w = std * jax.random.normal(wk, (fan_out, fan_in), dtype=jnp.float32)
        bound = 1.0 / math.sqrt(fan_in)
        b = jax.random.uniform(bk, (fan_out,), minval=-bound, maxval=bound,
                               dtype=jnp.float32)
        params[f"w{idx + 1}"] = w
        params[f"b{idx + 1}"] = b
    return params


def net_reference(x, params):
    """Plain-JAX reference of the same forward pass (high-precision dots)."""
    hp = jax.lax.Precision.HIGHEST
    h1 = jnp.dot(x, params["w1"].T, precision=hp) + params["b1"]
    h2 = jnp.tanh(jnp.dot(h1, params["w2"].T, precision=hp) + params["b2"])
    h3 = jnp.dot(h2, params["w3"].T, precision=hp) + params["b3"]
    return jax.nn.sigmoid(h3)


if __name__ == "__main__":
    key = jax.random.PRNGKey(0)
    k_param, k_x = jax.random.split(key)

    input_dimension = 128   # lane-dense input rows (multiple of 128)
    batch = 256             # small demo; auto-tiler picks 2 tiles of 128 rows
    multi_task = True

    params = init_params(k_param, input_dimension, multi_task=multi_task)
    x = jax.random.normal(k_x, (batch, input_dimension), dtype=jnp.float32)

    out = jax.block_until_ready(net_forward(x, params))
    ref = net_reference(x, params)

    assert out.shape == (batch, 2)
    assert bool(jnp.allclose(out, ref, atol=5e-3, rtol=5e-3)), (
        float(jnp.max(jnp.abs(out - ref))))

    print("KERNEL_OK")
</pallas_src>

<mosaic_0001>
module attributes {stable_mosaic.version = 11 : i64} {
  func.func @_mlp_kernel(%arg0: i32, %arg1: memref<128x128xf32, #tpu.memory_space<vmem>>, %arg2: memref<2x128xf32, #tpu.memory_space<vmem>>, %arg3: memref<4x2xf32, #tpu.memory_space<smem>>, %arg4: memref<2x4xf32, #tpu.memory_space<smem>>, %arg5: memref<2xf32, #tpu.memory_space<smem>>, %arg6: memref<4xf32, #tpu.memory_space<smem>>, %arg7: memref<2xf32, #tpu.memory_space<smem>>, %arg8: memref<2x128xf32, #tpu.memory_space<vmem>>) attributes {dimension_semantics = [#tpu.dimension_semantics<parallel>], iteration_bounds = array<i64: 2>, scalar_prefetch = 0 : i64, scratch_operands = 0 : i64, tpu.core_type = #tpu.core_type<tc>, window_params = [{transform_indices = @transform_0, window_bounds = array<i64: 128, 128>}, {pipeline_mode = #tpu.pipeline_mode<synchronous>, transform_indices = @transform_1, window_bounds = array<i64: 2, 128>}, {transform_indices = @transform_2, window_bounds = array<i64: 4, 2>}, {transform_indices = @transform_3, window_bounds = array<i64: 2, 4>}, {transform_indices = @transform_4, window_bounds = array<i64: 2>}, {transform_indices = @transform_5, window_bounds = array<i64: 4>}, {transform_indices = @transform_6, window_bounds = array<i64: 2>}, {transform_indices = @transform_7, window_bounds = array<i64: 2, 128>}]} {
    %c0 = arith.constant 0 : index
    %c0_0 = arith.constant 0 : index
    %0 = vector.load %arg2[%c0, %c0_0] : memref<2x128xf32, #tpu.memory_space<vmem>>, vector<2x128xf32>
    %c0_1 = arith.constant 0 : index
    %c0_2 = arith.constant 0 : index
    %1 = vector.load %arg1[%c0_1, %c0_2] : memref<128x128xf32, #tpu.memory_space<vmem>>, vector<128x128xf32>
    %cst = arith.constant dense<0.000000e+00> : vector<2x128xf32>
    %2 = tpu.matmul %0, %1, %cst {dimension_numbers = #tpu.dot_dimension_numbers<[1], [1], [0], [0], [0, 0, 1, 0], [], []>} : vector<2x128xf32>, vector<128x128xf32>, vector<2x128xf32> -> vector<2x128xf32>
    %3 = vector.extract_strided_slice %2 {offsets = [0, 0], sizes = [1, 128], strides = [1, 1]} : vector<2x128xf32> to vector<1x128xf32>
    %c0_3 = arith.constant 0 : index
    %4 = memref.load %arg5[%c0_3] : memref<2xf32, #tpu.memory_space<smem>>
    %5 = vector.broadcast %4 : f32 to vector<1x128xf32>
    %6 = arith.addf %3, %5 : vector<1x128xf32>
    %7 = vector.extract_strided_slice %2 {offsets = [1, 0], sizes = [1, 128], strides = [1, 1]} : vector<2x128xf32> to vector<1x128xf32>
    %c1 = arith.constant 1 : index
    %8 = memref.load %arg5[%c1] : memref<2xf32, #tpu.memory_space<smem>>
    %9 = vector.broadcast %8 : f32 to vector<1x128xf32>
    %10 = arith.addf %7, %9 : vector<1x128xf32>
    %c0_4 = arith.constant 0 : index
    %c0_5 = arith.constant 0 : index
    %11 = memref.load %arg3[%c0_4, %c0_5] : memref<4x2xf32, #tpu.memory_space<smem>>
    %12 = vector.broadcast %11 : f32 to vector<1x128xf32>
    %13 = arith.mulf %6, %12 : vector<1x128xf32>
    %c0_6 = arith.constant 0 : index
    %c1_7 = arith.constant 1 : index
    %14 = memref.load %arg3[%c0_6, %c1_7] : memref<4x2xf32, #tpu.memory_space<smem>>
    %15 = vector.broadcast %14 : f32 to vector<1x128xf32>
    %16 = arith.mulf %10, %15 : vector<1x128xf32>
    %17 = arith.addf %13, %16 : vector<1x128xf32>
    %c0_8 = arith.constant 0 : index
    %18 = memref.load %arg6[%c0_8] : memref<4xf32, #tpu.memory_space<smem>>
    %19 = vector.broadcast %18 : f32 to vector<1x128xf32>
    %20 = arith.addf %17, %19 : vector<1x128xf32>
    %21 = math.tanh %20 : vector<1x128xf32>
    %c1_9 = arith.constant 1 : index
    %c0_10 = arith.constant 0 : index
    %22 = memref.load %arg3[%c1_9, %c0_10] : memref<4x2xf32, #tpu.memory_space<smem>>
    %23 = vector.broadcast %22 : f32 to vector<1x128xf32>
    %24 = arith.mulf %6, %23 : vector<1x128xf32>
    %c1_11 = arith.constant 1 : index
    %c1_12 = arith.constant 1 : index
    %25 = memref.load %arg3[%c1_11, %c1_12] : memref<4x2xf32, #tpu.memory_space<smem>>
    %26 = vector.broadcast %25 : f32 to vector<1x128xf32>
    %27 = arith.mulf %10, %26 : vector<1x128xf32>
    %28 = arith.addf %24, %27 : vector<1x128xf32>
    %c1_13 = arith.constant 1 : index
    %29 = memref.load %arg6[%c1_13] : memref<4xf32, #tpu.memory_space<smem>>
    %30 = vector.broadcast %29 : f32 to vector<1x128xf32>
    %31 = arith.addf %28, %30 : vector<1x128xf32>
    %32 = math.tanh %31 : vector<1x128xf32>
    %c2 = arith.constant 2 : index
    %c0_14 = arith.constant 0 : index
    %33 = memref.load %arg3[%c2, %c0_14] : memref<4x2xf32, #tpu.memory_space<smem>>
    %34 = vector.broadcast %33 : f32 to vector<1x128xf32>
    %35 = arith.mulf %6, %34 : vector<1x128xf32>
    %c2_15 = arith.constant 2 : index
    %c1_16 = arith.constant 1 : index
    %36 = memref.load %arg3[%c2_15, %c1_16] : memref<4x2xf32, #tpu.memory_space<smem>>
    %37 = vector.broadcast %36 : f32 to vector<1x128xf32>
    %38 = arith.mulf %10, %37 : vector<1x128xf32>
    %39 = arith.addf %35, %38 : vector<1x128xf32>
    %c2_17 = arith.constant 2 : index
    %40 = memref.load %arg6[%c2_17] : memref<4xf32, #tpu.memory_space<smem>>
    %41 = vector.broadcast %40 : f32 to vector<1x128xf32>
    %42 = arith.addf %39, %41 : vector<1x128xf32>
    %43 = math.tanh %42 : vector<1x128xf32>
    %c3 = arith.constant 3 : index
    %c0_18 = arith.constant 0 : index
    %44 = memref.load %arg3[%c3, %c0_18] : memref<4x2xf32, #tpu.memory_space<smem>>
    %45 = vector.broadcast %44 : f32 to vector<1x128xf32>
    %46 = arith.mulf %6, %45 : vector<1x128xf32>
    %c3_19 = arith.constant 3 : index
    %c1_20 = arith.constant 1 : index
    %47 = memref.load %arg3[%c3_19, %c1_20] : memref<4x2xf32, #tpu.memory_space<smem>>
    %48 = vector.broadcast %47 : f32 to vector<1x128xf32>
    %49 = arith.mulf %10, %48 : vector<1x128xf32>
    %50 = arith.addf %46, %49 : vector<1x128xf32>
    %c3_21 = arith.constant 3 : index
    %51 = memref.load %arg6[%c3_21] : memref<4xf32, #tpu.memory_space<smem>>
    %52 = vector.broadcast %51 : f32 to vector<1x128xf32>
    %53 = arith.addf %50, %52 : vector<1x128xf32>
    %54 = math.tanh %53 : vector<1x128xf32>
    %c0_22 = arith.constant 0 : index
    %c0_23 = arith.constant 0 : index
    %55 = memref.load %arg4[%c0_22, %c0_23] : memref<2x4xf32, #tpu.memory_space<smem>>
    %56 = vector.broadcast %55 : f32 to vector<1x128xf32>
    %57 = arith.mulf %21, %56 : vector<1x128xf32>
    %c0_24 = arith.constant 0 : index
    %c1_25 = arith.constant 1 : index
    %58 = memref.load %arg4[%c0_24, %c1_25] : memref<2x4xf32, #tpu.memory_space<smem>>
    %59 = vector.broadcast %58 : f32 to vector<1x128xf32>
    %60 = arith.mulf %32, %59 : vector<1x128xf32>
    %61 = arith.addf %57, %60 : vector<1x128xf32>
    %c0_26 = arith.constant 0 : index
    %c2_27 = arith.constant 2 : index
    %62 = memref.load %arg4[%c0_26, %c2_27] : memref<2x4xf32, #tpu.memory_space<smem>>
    %63 = vector.broadcast %62 : f32 to vector<1x128xf32>
    %64 = arith.mulf %43, %63 : vector<1x128xf32>
    %65 = arith.addf %61, %64 : vector<1x128xf32>
    %c0_28 = arith.constant 0 : index
    %c3_29 = arith.constant 3 : index
    %66 = memref.load %arg4[%c0_28, %c3_29] : memref<2x4xf32, #tpu.memory_space<smem>>
    %67 = vector.broadcast %66 : f32 to vector<1x128xf32>
    %68 = arith.mulf %54, %67 : vector<1x128xf32>
    %69 = arith.addf %65, %68 : vector<1x128xf32>
    %c0_30 = arith.constant 0 : index
    %70 = memref.load %arg7[%c0_30] : memref<2xf32, #tpu.memory_space<smem>>
    %71 = vector.broadcast %70 : f32 to vector<1x128xf32>
    %72 = arith.addf %69, %71 : vector<1x128xf32>
    %73 = arith.negf %72 : vector<1x128xf32>
    %74 = math.exp %73 : vector<1x128xf32>
    %cst_31 = arith.constant 1.000000e+00 : f32
    %75 = vector.broadcast %cst_31 : f32 to vector<1x128xf32>
    %76 = arith.addf %75, %74 : vector<1x128xf32>
    %77 = arith.divf %75, %76 : vector<1x128xf32>
    %c1_32 = arith.constant 1 : index
    %c0_33 = arith.constant 0 : index
    %78 = memref.load %arg4[%c1_32, %c0_33] : memref<2x4xf32, #tpu.memory_space<smem>>
    %79 = vector.broadcast %78 : f32 to vector<1x128xf32>
    %80 = arith.mulf %21, %79 : vector<1x128xf32>
    %c1_34 = arith.constant 1 : index
    %c1_35 = arith.constant 1 : index
    %81 = memref.load %arg4[%c1_34, %c1_35] : memref<2x4xf32, #tpu.memory_space<smem>>
    %82 = vector.broadcast %81 : f32 to vector<1x128xf32>
    %83 = arith.mulf %32, %82 : vector<1x128xf32>
    %84 = arith.addf %80, %83 : vector<1x128xf32>
    %c1_36 = arith.constant 1 : index
    %c2_37 = arith.constant 2 : index
    %85 = memref.load %arg4[%c1_36, %c2_37] : memref<2x4xf32, #tpu.memory_space<smem>>
    %86 = vector.broadcast %85 : f32 to vector<1x128xf32>
    %87 = arith.mulf %43, %86 : vector<1x128xf32>
    %88 = arith.addf %84, %87 : vector<1x128xf32>
    %c1_38 = arith.constant 1 : index
    %c3_39 = arith.constant 3 : index
    %89 = memref.load %arg4[%c1_38, %c3_39] : memref<2x4xf32, #tpu.memory_space<smem>>
    %90 = vector.broadcast %89 : f32 to vector<1x128xf32>
    %91 = arith.mulf %54, %90 : vector<1x128xf32>
    %92 = arith.addf %88, %91 : vector<1x128xf32>
    %c1_40 = arith.constant 1 : index
    %93 = memref.load %arg7[%c1_40] : memref<2xf32, #tpu.memory_space<smem>>
    %94 = vector.broadcast %93 : f32 to vector<1x128xf32>
    %95 = arith.addf %92, %94 : vector<1x128xf32>
    %96 = arith.negf %95 : vector<1x128xf32>
    %97 = math.exp %96 : vector<1x128xf32>
    %cst_41 = arith.constant 1.000000e+00 : f32
    %98 = vector.broadcast %cst_41 : f32 to vector<1x128xf32>
    %99 = arith.addf %98, %97 : vector<1x128xf32>
    %100 = arith.divf %98, %99 : vector<1x128xf32>
    %101 = tpu.concatenate %77, %100 in 0 : vector<1x128xf32>, vector<1x128xf32> -> vector<2x128xf32>
    %c0_42 = arith.constant 0 : index
    %c0_43 = arith.constant 0 : index
    %102 = vector.load %arg8[%c0_42, %c0_43] : memref<2x128xf32, #tpu.memory_space<vmem>>, vector<2x128xf32>
    tpu.vector_store %arg8[%c0_42, %c0_43], %101 {strides = array<i32>} : memref<2x128xf32, #tpu.memory_space<vmem>>, vector<2x128xf32>,
    return
  }
  func.func @transform_0(%arg0: i32) -> (i32, i32) {
    %c0_i32 = arith.constant 0 : i32
    %c0_i32_0 = arith.constant 0 : i32
    return %arg0, %c0_i32 : i32, i32
  }
  func.func @transform_1(%arg0: i32) -> (i32, i32) {
    %c0_i32 = arith.constant 0 : i32
    %c0_i32_0 = arith.constant 0 : i32
    %c0_i32_1 = arith.constant 0 : i32
    return %c0_i32, %c0_i32_0 : i32, i32
  }
  func.func @transform_2(%arg0: i32) -> (i32, i32) {
    %c0_i32 = arith.constant 0 : i32
    %c0_i32_0 = arith.constant 0 : i32
    %c0_i32_1 = arith.constant 0 : i32
    return %c0_i32, %c0_i32_0 : i32, i32
  }
  func.func @transform_3(%arg0: i32) -> (i32, i32) {
    %c0_i32 = arith.constant 0 : i32
    %c0_i32_0 = arith.constant 0 : i32
    %c0_i32_1 = arith.constant 0 : i32
    return %c0_i32, %c0_i32_0 : i32, i32
  }
  func.func @transform_4(%arg0: i32) -> i32 {
    %c0_i32 = arith.constant 0 : i32
    %c0_i32_0 = arith.constant 0 : i32
    return %c0_i32 : i32
  }
  func.func @transform_5(%arg0: i32) -> i32 {
    %c0_i32 = arith.constant 0 : i32
    %c0_i32_0 = arith.constant 0 : i32
    return %c0_i32 : i32
  }
  func.func @transform_6(%arg0: i32) -> i32 {
    %c0_i32 = arith.constant 0 : i32
    %c0_i32_0 = arith.constant 0 : i32
    return %c0_i32 : i32
  }
  func.func @transform_7(%arg0: i32) -> (i32, i32) {
    %c0_i32 = arith.constant 0 : i32
    %c0_i32_0 = arith.constant 0 : i32
    return %c0_i32, %arg0 : i32, i32
  }
}

</mosaic_0001>

<llo_original>
// kernel: tpu_custom_call.1
$region0: #{tpu_custom_call.1}
  #allocation0 [shape = 'u32[]', space=smem, size = 0x4, offset = 0x4, fixed_abs, tag = 'smem constant byte address 0x4 - core index']
  #allocation1 [shape = 'u32[144,128]{1,0:T(1,128)}', space=vmem, size = 0x12000, scoped, tag = 'internal scratch']
  %s0 = inlined_call_operand.hbm [shape: f32[256,128], index: 0, kind: input, shape index: {}]
  %s1 = inlined_call_operand.vmem [shape: f32[2,128], index: 1, kind: input, shape index: {}]
  %s2 = inlined_call_operand.vmem [shape: f32[4,2], index: 2, kind: input, shape index: {}]
  %s3 = inlined_call_operand.vmem [shape: f32[2,4], index: 3, kind: input, shape index: {}]
  %s4 = inlined_call_operand.vmem [shape: f32[2], index: 4, kind: input, shape index: {}]
  %s5 = inlined_call_operand.vmem [shape: f32[4], index: 5, kind: input, shape index: {}]
  %s6 = inlined_call_operand.vmem [shape: f32[2], index: 6, kind: input, shape index: {}]
  %s7 = inlined_call_operand.hbm [shape: f32[2,256], index: 7, kind: output, shape index: {}]
  %s8 = sld [smem:[#allocation0]]
  $region85: #{tpu_custom_call.1} parent=0
    _
  %s10 = ssub.s32 1, %s8
  %s11 = scalar_select 0, %s10, %s8
  $region1: #{tpu_custom_call.1} parent=0
    #allocation2 [shape = 'u8[131072]{0}', space=vmem, size = 0x20000, scoped, tag = 'input window, operand 0']
    #allocation3 [shape = 's32[2]{0}', space=sflag, size = 0x8, scoped, tag = 'scoped memory for tpu_custom_call.1']
    #allocation4 [shape = 's32[2]{0}', space=sflag, size = 0x8, scoped, tag = 'scoped memory for tpu_custom_call.1']
    #allocation5 [shape = 's32[2]{0}', space=sflag, size = 0x8, scoped, tag = 'scoped memory for tpu_custom_call.1']
    #allocation6 [shape = 'u8[2048]{0}', space=smem, size = 0x800, scoped, tag = 'input window, operand 2, single buffered']
    #allocation7 [shape = 'u8[1024]{0}', space=smem, size = 0x400, scoped, tag = 'input window, operand 3, single buffered']
    #allocation8 [shape = 's32[1]{0}', space=sflag, size = 0x4, scoped, tag = 'scoped memory for tpu_custom_call.1']
    #allocation9 [shape = 'u8[512]{0}', space=smem, size = 0x200, scoped, tag = 'input window, operand 4, single buffered']
    #allocation10 [shape = 'u8[512]{0}', space=smem, size = 0x200, scoped, tag = 'input window, operand 5, single buffered']
    #allocation11 [shape = 's32[1]{0}', space=sflag, size = 0x4, scoped, tag = 'scoped memory for tpu_custom_call.1']
    #allocation12 [shape = 'u8[512]{0}', space=smem, size = 0x200, scoped, tag = 'input window, operand 6, single buffered']
    #allocation13 [shape = 'u8[2048]{0}', space=vmem, size = 0x800, scoped, tag = 'output window, operand 0']
    %12 = vsyncpa [#allocation3], 0
    %s13 = scalar_lea.sflag [#allocation3], 1
    %14 = vsyncpa %s13, 0
    %15 = vsyncpa [#allocation5], 0
    %16 = vsyncpa [#allocation8], 0
    %17 = vsyncpa [#allocation11], 0
    %18 = vsyncpa [#allocation4], 0
    %s19 = scalar_lea.sflag [#allocation4], 1
    %20 = vsyncpa %s19, 0
    loop: start=0, step=1, limit=4
    $region2: #{tpu_custom_call.1} parent=1 // loop_pre_header
      _
    $region3: #{tpu_custom_call.1} parent=1 // loop_header
      %s22 = sphi 0, %s26
      %p23 = scmp.ge.s32.totalorder %s22, 4
      %s32 = sphi 0, %s34
      %s35 = sphi 0, %s32
      %s36 = sphi 0, %s35
      %s52 = sphi 0, %s36
      %s56 = sphi 0, %s56
      %s58 = sphi 0, %s56
      %s59 = sphi 0, %s58
      %s73 = sphi 0, %s59
      %s77 = sphi 0, %s77
      %s79 = sphi 0, %s77
      %s80 = sphi 0, %s79
      %s94 = sphi 0, %s80
      %s98 = sphi 0, %s98
      %s100 = sphi 0, %s98
      %s101 = sphi 0, %s100
      %s115 = sphi 0, %s101
      %s119 = sphi 0, %s119
      %s121 = sphi 0, %s119
      %s122 = sphi 0, %s121
      %s136 = sphi 0, %s122
      %s140 = sphi 0, %s140
      %s142 = sphi 0, %s140
      %s143 = sphi 0, %s142
      %s157 = sphi 0, %s143
      %s161 = sphi 0, %s161
      %s163 = sphi 0, %s161
      %s164 = sphi 0, %s163
      %s178 = sphi 0, %s164
      %s184 = sphi 0, %s186
      %s187 = sphi 0, %s184
      %s188 = sphi 0, %s187
      %s204 = sphi 0, %s188
    $region4: #{tpu_custom_call.1} parent=1 // loop_header_branch
      %25 = sbr.rel (%p23) target = $region8
    $region5: #{tpu_custom_call.1} parent=1 // loop_body
      %s27 = ssub.s32 %s22, 1
      %s28 = ssub.s32 %s22, 2
      %s29 = sadd.s32 %s22, 1
      %s30 = ssub.s32 %s22, %s29
      %p31 = scmp.eq.s32.totalorder %s30, 0
      %s33 = sadd.s32 %s32, 1
      %s34 = scalar_select %p31, %s32, %s33
      %p37 = pneg %p31
      %p38 = scmp.eq.s32.totalorder %s22, 1
      %p39 = por %p37, %p38
      %p40 = scmp.ne.s32.totalorder %s32, %s35
      %p41 = scmp.eq.s32.totalorder %s22, 0
      %p42 = por %p40, %p41
      %p43 = scmp.ne.s32.totalorder %s32, %s35
      %p44 = scmp.eq.s32.totalorder %s27, 1
      %p45 = por %p43, %p44
      %p46 = scmp.ne.s32.totalorder %s35, %s36
      %p47 = scmp.eq.s32.totalorder %s27, 0
      %p48 = por %p46, %p47
      %p49 = scmp.ne.s32.totalorder %s35, %s36
      %p50 = scmp.eq.s32.totalorder %s28, 1
      %p51 = por %p49, %p50
      %p53 = scmp.ne.s32.totalorder %s36, %s52
      %p54 = scmp.eq.s32.totalorder %s28, 0
      %p55 = por %p53, %p54
      %s57 = sadd.s32 %s56, 1
      %p60 = scmp.eq.s32.totalorder %s22, 1
      %p61 = scmp.ne.s32.totalorder %s56, %s58
      %p62 = scmp.eq.s32.totalorder %s22, 0
      %p63 = por %p61, %p62
      %p64 = scmp.ne.s32.totalorder %s56, %s58
      %p65 = scmp.eq.s32.totalorder %s27, 1
      %p66 = por %p64, %p65
      %p67 = scmp.ne.s32.totalorder %s58, %s59
      %p68 = scmp.eq.s32.totalorder %s27, 0
      %p69 = por %p67, %p68
      %p70 = scmp.ne.s32.totalorder %s58, %s59
      %p71 = scmp.eq.s32.totalorder %s28, 1
      %p72 = por %p70, %p71
      %p74 = scmp.ne.s32.totalorder %s59, %s73
      %p75 = scmp.eq.s32.totalorder %s28, 0
      %p76 = por %p74, %p75
      %s78 = sadd.s32 %s77, 1
      %p81 = scmp.eq.s32.totalorder %s22, 1
      %p82 = scmp.ne.s32.totalorder %s77, %s79
      %p83 = scmp.eq.s32.totalorder %s22, 0
      %p84 = por %p82, %p83
      %p85 = scmp.ne.s32.totalorder %s77, %s79
      %p86 = scmp.eq.s32.totalorder %s27, 1
      %p87 = por %p85, %p86
      %p88 = scmp.ne.s32.totalorder %s79, %s80
      %p89 = scmp.eq.s32.totalorder %s27, 0
      %p90 = por %p88, %p89
      %p91 = scmp.ne.s32.totalorder %s79, %s80
      %p92 = scmp.eq.s32.totalorder %s28, 1
      %p93 = por %p91, %p92
      %p95 = scmp.ne.s32.totalorder %s80, %s94
      %p96 = scmp.eq.s32.totalorder %s28, 0
      %p97 = por %p95, %p96
      %s99 = sadd.s32 %s98, 1
      %p102 = scmp.eq.s32.totalorder %s22, 1
      %p103 = scmp.ne.s32.totalorder %s98, %s100
      %p104 = scmp.eq.s32.totalorder %s22, 0
      %p105 = por %p103, %p104
      %p106 = scmp.ne.s32.totalorder %s98, %s100
      %p107 = scmp.eq.s32.totalorder %s27, 1
      %p108 = por %p106, %p107
      %p109 = scmp.ne.s32.totalorder %s100, %s101
      %p110 = scmp.eq.s32.totalorder %s27, 0
      %p111 = por %p109, %p110
      %p112 = scmp.ne.s32.totalorder %s100, %s101
      %p113 = scmp.eq.s32.totalorder %s28, 1
      %p114 = por %p112, %p113
      %p116 = scmp.ne.s32.totalorder %s101, %s115
      %p117 = scmp.eq.s32.totalorder %s28, 0
      %p118 = por %p116, %p117
      %s120 = sadd.s32 %s119, 1
      %p123 = scmp.eq.s32.totalorder %s22, 1
      %p124 = scmp.ne.s32.totalorder %s119, %s121
      %p125 = scmp.eq.s32.totalorder %s22, 0
      %p126 = por %p124, %p125
      %p127 = scmp.ne.s32.totalorder %s119, %s121
      %p128 = scmp.eq.s32.totalorder %s27, 1
      %p129 = por %p127, %p128
      %p130 = scmp.ne.s32.totalorder %s121, %s122
      %p131 = scmp.eq.s32.totalorder %s27, 0
      %p132 = por %p130, %p131
      %p133 = scmp.ne.s32.totalorder %s121, %s122
      %p134 = scmp.eq.s32.totalorder %s28, 1
      %p135 = por %p133, %p134
      %p137 = scmp.ne.s32.totalorder %s122, %s136
      %p138 = scmp.eq.s32.totalorder %s28, 0
      %p139 = por %p137, %p138
      %s141 = sadd.s32 %s140, 1
      %p144 = scmp.eq.s32.totalorder %s22, 1
      %p145 = scmp.ne.s32.totalorder %s140, %s142
      %p146 = scmp.eq.s32.totalorder %s22, 0
      %p147 = por %p145, %p146
      %p148 = scmp.ne.s32.totalorder %s140, %s142
      %p149 = scmp.eq.s32.totalorder %s27, 1
      %p150 = por %p148, %p149
      %p151 = scmp.ne.s32.totalorder %s142, %s143
      %p152 = scmp.eq.s32.totalorder %s27, 0
      %p153 = por %p151, %p152
      %p154 = scmp.ne.s32.totalorder %s142, %s143
      %p155 = scmp.eq.s32.totalorder %s28, 1
      %p156 = por %p154, %p155
      %p158 = scmp.ne.s32.totalorder %s143, %s157
      %p159 = scmp.eq.s32.totalorder %s28, 0
      %p160 = por %p158, %p159
      %s162 = sadd.s32 %s161, 1
      %p165 = scmp.eq.s32.totalorder %s22, 1
      %p166 = scmp.ne.s32.totalorder %s161, %s163
      %p167 = scmp.eq.s32.totalorder %s22, 0
      %p168 = por %p166, %p167
      %p169 = scmp.ne.s32.totalorder %s161, %s163
      %p170 = scmp.eq.s32.totalorder %s27, 1
      %p171 = por %p169, %p170
      %p172 = scmp.ne.s32.totalorder %s163, %s164
      %p173 = scmp.eq.s32.totalorder %s27, 0
      %p174 = por %p172, %p173
      %p175 = scmp.ne.s32.totalorder %s163, %s164
      %p176 = scmp.eq.s32.totalorder %s28, 1
      %p177 = por %p175, %p176
      %p179 = scmp.ne.s32.totalorder %s164, %s178
      %p180 = scmp.eq.s32.totalorder %s28, 0
      %p181 = por %p179, %p180
      %s182 = ssub.s32 %s22, %s29
      %p183 = scmp.eq.s32.totalorder %s182, 0
      %s185 = sadd.s32 %s184, 1
      %s186 = scalar_select %p183, %s184, %s185
      %p189 = pneg %p183
      %p190 = scmp.eq.s32.totalorder %s22, 1
      %p191 = por %p189, %p190
      %p192 = scmp.ne.s32.totalorder %s184, %s187
      %p193 = scmp.eq.s32.totalorder %s22, 0
      %p194 = por %p192, %p193
      %p195 = scmp.ne.s32.totalorder %s184, %s187
      %p196 = scmp.eq.s32.totalorder %s27, 1
      %p197 = por %p195, %p196
      %p198 = scmp.ne.s32.totalorder %s187, %s188
      %p199 = scmp.eq.s32.totalorder %s27, 0
      %p200 = por %p198, %p199
      %p201 = scmp.ne.s32.totalorder %s187, %s188
      %p202 = scmp.eq.s32.totalorder %s28, 1
      %p203 = por %p201, %p202
      %p205 = scmp.ne.s32.totalorder %s188, %s204
      %p206 = scmp.eq.s32.totalorder %s28, 0
      %p207 = por %p205, %p206
      %p208 = scmp.le.s32.totalorder 1, %s22
      %p209 = scmp.lt.s32.totalorder %s22, 3
      %p210 = pnand %p208, %p209
      %p211 = pneg %p210
      // Predicated region
      $region9: #{tpu_custom_call.1} parent=5 // pred_check
        _
      $region10: #{tpu_custom_call.1} parent=5 // pred_check_branch
        %213 = sbr.rel (%p210) target = $region12
      $region11: #{tpu_custom_call.1} parent=5 // pred_region
        %s214 = ssub.s32 %s22, 1
        // Predicated region
        $region13: #{tpu_custom_call.1} parent=11 // pred_check
          %p215 = pneg %p69
        $region14: #{tpu_custom_call.1} parent=11 // pred_check_branch
          %217 = sbr.rel (%p215) target = $region16
        $region15: #{tpu_custom_call.1} parent=11 // pred_region
          _
        $region16: #{tpu_custom_call.1} parent=11 // pred_fallthru
          _
        // Predicated region
        $region17: #{tpu_custom_call.1} parent=11 // pred_check
          %p218 = pneg %p90
        $region18: #{tpu_custom_call.1} parent=11 // pred_check_branch
          %220 = sbr.rel (%p218) target = $region20
        $region19: #{tpu_custom_call.1} parent=11 // pred_region
          %s222 = ssub.s32 64, 64
          %223 = vsyncadd [#allocation5], %s222
          %s225 = sshll.u32 %s2, 4
          %s226 = int_to_ptr.vmem [resolvable:$true] %s225
          %228 = dma.vmem_to_smem %s226, 64, [#allocation6], [#allocation5]
        $region20: #{tpu_custom_call.1} parent=11 // pred_fallthru
          _
        // Predicated region
        $region21: #{tpu_custom_call.1} parent=11 // pred_check
          %p229 = pneg %p111
        $region22: #{tpu_custom_call.1} parent=11 // pred_check_branch
          %231 = sbr.rel (%p229) target = $region24
        $region23: #{tpu_custom_call.1} parent=11 // pred_region
          %s233 = ssub.s32 32, 32
          %234 = vsyncadd [#allocation8], %s233
          %s236 = sshll.u32 %s3, 4
          %s237 = int_to_ptr.vmem [resolvable:$true] %s236
          %239 = dma.vmem_to_smem %s237, 32, [#allocation7], [#allocation8]
        $region24: #{tpu_custom_call.1} parent=11 // pred_fallthru
          _
        // Predicated region
        $region25: #{tpu_custom_call.1} parent=11 // pred_check
          %p240 = pneg %p132
        $region26: #{tpu_custom_call.1} parent=11 // pred_check_branch
          %242 = sbr.rel (%p240) target = $region28
        $region27: #{tpu_custom_call.1} parent=11 // pred_region
          %s244 = ssub.s32 16, 16
          %245 = vsyncadd [#allocation8], %s244
          %s247 = sshll.u32 %s4, 4
          %s248 = int_to_ptr.vmem [resolvable:$true] %s247
          %250 = dma.vmem_to_smem %s248, 16, [#allocation9], [#allocation8]
        $region28: #{tpu_custom_call.1} parent=11 // pred_fallthru
          _
        // Predicated region
        $region29: #{tpu_custom_call.1} parent=11 // pred_check
          %p251 = pneg %p153
        $region30: #{tpu_custom_call.1} parent=11 // pred_check_branch
          %253 = sbr.rel (%p251) target = $region32
        $region31: #{tpu_custom_call.1} parent=11 // pred_region
          %s255 = ssub.s32 16, 16
          %256 = vsyncadd [#allocation11], %s255
          %s258 = sshll.u32 %s5, 4
          %s259 = int_to_ptr.vmem [resolvable:$true] %s258
          %261 = dma.vmem_to_smem %s259, 16, [#allocation10], [#allocation11]
        $region32: #{tpu_custom_call.1} parent=11 // pred_fallthru
          _
        // Predicated region
        $region33: #{tpu_custom_call.1} parent=11 // pred_check
          %p262 = pneg %p174
        $region34: #{tpu_custom_call.1} parent=11 // pred_check_branch
          %264 = sbr.rel (%p262) target = $region36
        $region35: #{tpu_custom_call.1} parent=11 // pred_region
          %s266 = ssub.s32 16, 16
          %267 = vsyncadd [#allocation11], %s266
          %s269 = sshll.u32 %s6, 4
          %s270 = int_to_ptr.vmem [resolvable:$true] %s269
          %272 = dma.vmem_to_smem %s270, 16, [#allocation12], [#allocation11]
        $region36: #{tpu_custom_call.1} parent=11 // pred_fallthru
          _
      $region12: #{tpu_custom_call.1} parent=5 // pred_fallthru
        _
      %p273 = scmp.lt.s32.totalorder %s22, 2
      // Predicated region
      $region37: #{tpu_custom_call.1} parent=5 // pred_check
        %p274 = pneg %p273
      $region38: #{tpu_custom_call.1} parent=5 // pred_check_branch
        %276 = sbr.rel (%p274) target = $region40
      $region39: #{tpu_custom_call.1} parent=5 // pred_region
        // Predicated region
        $region41: #{tpu_custom_call.1} parent=39 // pred_check
          %p277 = pneg %p42
        $region42: #{tpu_custom_call.1} parent=39 // pred_check_branch
          %279 = sbr.rel (%p277) target = $region44
        $region43: #{tpu_custom_call.1} parent=39 // pred_region
          %s280 = sand.u32 %s32, 1
          %s281 = scalar_lea.sflag [#allocation3], %s280
          %s282 = sand.u32 %s32, 1
          %s283 = smul.addr %s282, 128
          %s284 = scalar_lea.vmem [#allocation2], %s283
          %s285 = smul.u32 16, %s22
          %s287 = ssub.s32 2048, 2048
          %288 = vsyncadd %s281, %s287
          %s289 = smul.addr %s285, 128
          %s290 = scalar_lea.hbm %s0, %s289
          %s291 = sshll.u32 %s284, 4
          %s292 = int_to_ptr.vmem [resolvable:$true] %s291
          %297 = dma.hbm_to_vmem [thread:$0]  %s290, 2048, %s292, %s281, 128, 128, 8
        $region44: #{tpu_custom_call.1} parent=39 // pred_fallthru
          _
      $region40: #{tpu_custom_call.1} parent=5 // pred_fallthru
        _
      %p298 = scmp.le.s32.totalorder 1, %s22
      %p299 = scmp.lt.s32.totalorder %s22, 3
      %p300 = pnand %p298, %p299
      %p301 = pneg %p300
      // Predicated region
      $region45: #{tpu_custom_call.1} parent=5 // pred_check
        _
      $region46: #{tpu_custom_call.1} parent=5 // pred_check_branch
        %303 = sbr.rel (%p300) target = $region48
      $region47: #{tpu_custom_call.1} parent=5 // pred_region
        %s304 = ssub.s32 %s22, 1
        %s305 = sand.u32 %s35, 1
        %s306 = scalar_lea.sflag [#allocation3], %s305
        %s307 = sand.u32 %s35, 1
        %s308 = smul.addr %s307, 128
        %s309 = scalar_lea.vmem [#allocation2], %s308
        // Predicated region
        $region49: #{tpu_custom_call.1} parent=47 // pred_check
          %p310 = pneg %p48
        $region50: #{tpu_custom_call.1} parent=47 // pred_check_branch
          %312 = sbr.rel (%p310) target = $region52
        $region51: #{tpu_custom_call.1} parent=47 // pred_region
          %313 = dma.done %s306, 2048
        $region52: #{tpu_custom_call.1} parent=47 // pred_fallthru
          _
        // Predicated region
        $region53: #{tpu_custom_call.1} parent=47 // pred_check
          %p314 = pneg %p90
        $region54: #{tpu_custom_call.1} parent=47 // pred_check_branch
          %316 = sbr.rel (%p314) target = $region56
        $region55: #{tpu_custom_call.1} parent=47 // pred_region
          %317 = dma.done [#allocation5], 64
        $region56: #{tpu_custom_call.1} parent=47 // pred_fallthru
          _
        // Predicated region
        $region57: #{tpu_custom_call.1} parent=47 // pred_check
          %p318 = pneg %p111
        $region58: #{tpu_custom_call.1} parent=47 // pred_check_branch
          %320 = sbr.rel (%p318) target = $region60
        $region59: #{tpu_custom_call.1} parent=47 // pred_region
          %321 = dma.done [#allocation8], 32
        $region60: #{tpu_custom_call.1} parent=47 // pred_fallthru
          _
        // Predicated region
        $region61: #{tpu_custom_call.1} parent=47 // pred_check
          %p322 = pneg %p132
        $region62: #{tpu_custom_call.1} parent=47 // pred_check_branch
          %324 = sbr.rel (%p322) target = $region64
        $region63: #{tpu_custom_call.1} parent=47 // pred_region
          %325 = dma.done [#allocation8], 16
        $region64: #{tpu_custom_call.1} parent=47 // pred_fallthru
          _
        // Predicated region
        $region65: #{tpu_custom_call.1} parent=47 // pred_check
          %p326 = pneg %p153
        $region66: #{tpu_custom_call.1} parent=47 // pred_check_branch
          %328 = sbr.rel (%p326) target = $region68
        $region67: #{tpu_custom_call.1} parent=47 // pred_region
          %329 = dma.done [#allocation11], 16
        $region68: #{tpu_custom_call.1} parent=47 // pred_fallthru
          _
        // Predicated region
        $region69: #{tpu_custom_call.1} parent=47 // pred_check
          %p330 = pneg %p174
        $region70: #{tpu_custom_call.1} parent=47 // pred_check_branch
          %332 = sbr.rel (%p330) target = $region72
        $region71: #{tpu_custom_call.1} parent=47 // pred_region
          %333 = dma.done [#allocation11], 16
        $region72: #{tpu_custom_call.1} parent=47 // pred_fallthru
          _
        %334 = sfence
        %s335 = sand.u32 %s35, 1
        %s336 = scalar_lea.sflag [#allocation3], %s335
        %s337 = sand.u32 %s35, 1
        %s338 = smul.addr %s337, 128
        %s339 = scalar_lea.vmem [#allocation2], %s338
        %p340 = pneg %p48
        %p341 = pneg %p45
        %p342 = pneg %p69
        %p343 = pneg %p66
        %p344 = pneg %p90
        %p345 = pneg %p87
        %p346 = pneg %p111
        %p347 = pneg %p108
        %p348 = pneg %p132
        %p349 = pneg %p129
        %p350 = pneg %p153
        %p351 = pneg %p150
        %p352 = pneg %p174
        %p353 = pneg %p171
        %p354 = pneg %p200
        %p355 = pneg %p197
        %s356 = sand.u32 %s187, 1
        %s357 = scalar_lea.sflag [#allocation4], %s356
        %s358 = sand.u32 %s187, 1
        %s359 = smul.addr %s358, 2
        %s360 = scalar_lea.vmem [#allocation13], %s359
        %s361 = smul.u32 16, %s27
        %v362 = vld [vmem:[%s1] sm:$0x3]
        %v363 = vld [vmem:[%s309] sm:$0xff]
        %v364 = vld [vmem:[%s309 + $0x8] sm:$0xff]
        %v365 = vld [vmem:[%s309 + $0x10] sm:$0xff]
        %v366 = vld [vmem:[%s309 + $0x18] sm:$0xff]
        %v367 = vld [vmem:[%s309 + $0x20] sm:$0xff]
        %v368 = vld [vmem:[%s309 + $0x28] sm:$0xff]
        %v369 = vld [vmem:[%s309 + $0x30] sm:$0xff]
        %v370 = vld [vmem:[%s309 + $0x38] sm:$0xff]
        %v371 = vld [vmem:[%s309 + $0x40] sm:$0xff]
        %v372 = vld [vmem:[%s309 + $0x48] sm:$0xff]
        %v373 = vld [vmem:[%s309 + $0x50] sm:$0xff]
        %v374 = vld [vmem:[%s309 + $0x58] sm:$0xff]
        %v375 = vld [vmem:[%s309 + $0x60] sm:$0xff]
        %v376 = vld [vmem:[%s309 + $0x68] sm:$0xff]
        %v377 = vld [vmem:[%s309 + $0x70] sm:$0xff]
        %v378 = vld [vmem:[%s309 + $0x78] sm:$0xff]
        %379 = vmatprep.subr.mxu0 0.0
        %380 = vmatpush1.xpose.msra.mxu0 %v363
        %381 = vmatprep.subr.mxu0 0.0
        %382 = vmatpush1.xpose.msra.mxu0 %v364
        %383 = vmatprep.subr.mxu0 0.0
        %384 = vmatpush1.xpose.msra.mxu0 %v365
        %385 = vmatprep.subr.mxu0 0.0
        %386 = vmatpush1.xpose.msra.mxu0 %v366
        %387 = vmatprep.subr.mxu0 0.0
        %388 = vmatpush1.xpose.msra.mxu0 %v367
        %389 = vmatprep.subr.mxu0 0.0
        %390 = vmatpush1.xpose.msra.mxu0 %v368
        %391 = vmatprep.subr.mxu0 0.0
        %392 = vmatpush1.xpose.msra.mxu0 %v369
        %393 = vmatprep.subr.mxu0 0.0
        %394 = vmatpush1.xpose.msra.mxu0 %v370
        %395 = vmatprep.subr.mxu0 0.0
        %396 = vmatpush1.xpose.msra.mxu0 %v371
        %397 = vmatprep.subr.mxu0 0.0
        %398 = vmatpush1.xpose.msra.mxu0 %v372
        %399 = vmatprep.subr.mxu0 0.0
        %400 = vmatpush1.xpose.msra.mxu0 %v373
        %401 = vmatprep.subr.mxu0 0.0
        %402 = vmatpush1.xpose.msra.mxu0 %v374
        %403 = vmatprep.subr.mxu0 0.0
        %404 = vmatpush1.xpose.msra.mxu0 %v375
        %405 = vmatprep.subr.mxu0 0.0
        %406 = vmatpush1.xpose.msra.mxu0 %v376
        %407 = vmatprep.subr.mxu0 0.0
        %408 = vmatpush1.xpose.msra.mxu0 %v377
        %409 = vmatprep.subr.mxu0 0.0
        %410 = vmatpush1.xpose.msra.mxu0 %v378
        %411 = vmatprep.subr.mxu0 0.0
        %412 = vmatpush1.xpose.msra.mxu0 0.0
        %413 = vmatprep.subr.mxu0 0.0
        %414 = vmatpush1.xpose.msra.mxu0 0.0
        %415 = vmatprep.subr.mxu0 0.0
        %416 = vmatpush1.xpose.msra.mxu0 0.0
        %417 = vmatprep.subr.mxu0 0.0
        %418 = vmatpush1.xpose.msra.mxu0 0.0
        %419 = vmatprep.subr.mxu0 0.0
        %420 = vmatpush1.xpose.msra.mxu0 0.0
        %421 = vmatprep.subr.mxu0 0.0
        %422 = vmatpush1.xpose.msra.mxu0 0.0
        %423 = vmatprep.subr.mxu0 0.0
        %424 = vmatpush1.xpose.msra.mxu0 0.0
        %425 = vmatprep.subr.mxu0 0.0
        %426 = vmatpush1.xpose.msra.mxu0 0.0
        %427 = vmatprep.subr.mxu0 0.0
        %428 = vmatpush1.xpose.msra.mxu0 0.0
        %429 = vmatprep.subr.mxu0 0.0
        %430 = vmatpush1.xpose.msra.mxu0 0.0
        %431 = vmatprep.subr.mxu0 0.0
        %432 = vmatpush1.xpose.msra.mxu0 0.0
        %433 = vmatprep.subr.mxu0 0.0
        %434 = vmatpush1.xpose.msra.mxu0 0.0
        %435 = vmatprep.subr.mxu0 0.0
        %436 = vmatpush1.xpose.msra.mxu0 0.0
        %437 = vmatprep.subr.mxu0 0.0
        %438 = vmatpush1.xpose.msra.mxu0 0.0
        %439 = vmatprep.subr.mxu0 0.0
        %440 = vmatpush1.xpose.msra.mxu0 0.0
        %441 = vmatprep.subr.mxu0 0.0
        %442 = vmatpush1.xpose.msra.mxu0 0.0
        %443 = vmatprep.mubr.f32.mxu0 0.0
        %444 = vmatmul.mubr.f32.gmra.mrb[0].mxu0 %v362
        %v445 = vpop.f32.mrb[0].mxu0
        %v446 = vadd.f32 0.0, %v445
        %v447 = vpop.f32.mrb[0].mxu0
        %448 = vdwg.mxu0
        %s449 = sld [smem:[#allocation9]]
        %v450 = vstv %s449
        %v451 = vadd.f32 %v446, %v450
        %s452 = sld [smem:[#allocation9 + $0x1]]
        %v453 = vstv %s452
        %v454 = vadd.f32 %v446, %v453
        %s455 = sld [smem:[#allocation6]]
        %v456 = vstv %s455
        %v457 = vmul.f32 %v451, %v456
        %s458 = sld [smem:[#allocation6 + $0x1]]
        %v459 = vstv %s458
        %v460 = vmul.f32 %v454, %v459
        %v462 = vrot.slane %v460, 1
        %v464 = vadd.f32 %v457, %v462
        %s465 = sld [smem:[#allocation10]]
        %v466 = vstv %s465
        %v467 = vadd.f32 %v464, %v466
        %v468 = vtanh.pop %v467
        %s469 = sld [smem:[#allocation6 + $0x80]]
        %v470 = vstv %s469
        %v471 = vmul.f32 %v451, %v470
        %s472 = sld [smem:[#allocation6 + $0x81]]
        %v473 = vstv %s472
        %v474 = vmul.f32 %v454, %v473
        %v476 = vrot.slane %v474, 1
        %v478 = vadd.f32 %v471, %v476
        %s479 = sld [smem:[#allocation10 + $0x1]]
        %v480 = vstv %s479
        %v481 = vadd.f32 %v478, %v480
        %v482 = vtanh.pop %v481
        %s483 = sld [smem:[#allocation6 + $0x100]]
        %v484 = vstv %s483
        %v485 = vmul.f32 %v451, %v484
        %s486 = sld [smem:[#allocation6 + $0x101]]
        %v487 = vstv %s486
        %v488 = vmul.f32 %v454, %v487
        %v490 = vrot.slane %v488, 1
        %v492 = vadd.f32 %v485, %v490
        %s493 = sld [smem:[#allocation10 + $0x2]]
        %v494 = vstv %s493
        %v495 = vadd.f32 %v492, %v494
        %v496 = vtanh.pop %v495
        %s497 = sld [smem:[#allocation6 + $0x180]]
        %v498 = vstv %s497
        %v499 = vmul.f32 %v451, %v498
        %s500 = sld [smem:[#allocation6 + $0x181]]
        %v501 = vstv %s500
        %v502 = vmul.f32 %v454, %v501
        %v504 = vrot.slane %v502, 1
        %v506 = vadd.f32 %v499, %v504
        %s507 = sld [smem:[#allocation10 + $0x3]]
        %v508 = vstv %s507
        %v509 = vadd.f32 %v506, %v508
        %v510 = vtanh.pop %v509
        %s511 = sld [smem:[#allocation7]]
        %v512 = vstv %s511
        %v513 = vmul.f32 %v468, %v512
        %s514 = sld [smem:[#allocation7 + $0x1]]
        %v515 = vstv %s514
        %v516 = vmul.f32 %v482, %v515
        %v517 = vadd.f32 %v513, %v516
        %s518 = sld [smem:[#allocation7 + $0x2]]
        %v519 = vstv %s518
        %v520 = vmul.f32 %v496, %v519
        %v521 = vadd.f32 %v517, %v520
        %s522 = sld [smem:[#allocation7 + $0x3]]
        %v523 = vstv %s522
        %v524 = vmul.f32 %v510, %v523
        %v525 = vadd.f32 %v521, %v524
        %s526 = sld [smem:[#allocation12]]
        %v527 = vstv %s526
        %v528 = vadd.f32 %v525, %v527
        %v529 = vxor.u32 %v528, 2147483648
        %v530 = vmul.f32 %v529, 1.442695
        %v531 = vpow.pop %v530
        %v532 = vadd.f32 %v531, 1.0
        %v533 = vrcp.pop %v532
        %v534 = vmul.f32 1.0, %v533
        %s535 = sld [smem:[#allocation7 + $0x80]]
        %v536 = vstv %s535
        %v537 = vmul.f32 %v468, %v536
        %s538 = sld [smem:[#allocation7 + $0x81]]
        %v539 = vstv %s538
        %v540 = vmul.f32 %v482, %v539
        %v541 = vadd.f32 %v537, %v540
        %s542 = sld [smem:[#allocation7 + $0x82]]
        %v543 = vstv %s542
        %v544 = vmul.f32 %v496, %v543
        %v545 = vadd.f32 %v541, %v544
        %s546 = sld [smem:[#allocation7 + $0x83]]
        %v547 = vstv %s546
        %v548 = vmul.f32 %v510, %v547
        %v549 = vadd.f32 %v545, %v548
        %s550 = sld [smem:[#allocation12 + $0x1]]
        %v551 = vstv %s550
        %v552 = vadd.f32 %v549, %v551
        %v553 = vxor.u32 %v552, 2147483648
        %v554 = vmul.f32 %v553, 1.442695
        %v555 = vpow.pop %v554
        %v556 = vadd.f32 %v555, 1.0
        %v557 = vrcp.pop %v556
        %v558 = vmul.f32 1.0, %v557
        %v560 = vrot.slane %v558, 7
        %vm562 = vcmask 1040384
        %v563 = vsel %vm562, %v534, %v560
        %564 = vst [vmem:[%s360] sm:$0x3] %v563
        %s565 = sand.u32 %s187, 1
        %s566 = scalar_lea.sflag [#allocation4], %s565
        %s567 = sand.u32 %s187, 1
        %s568 = smul.addr %s567, 2
        %s569 = scalar_lea.vmem [#allocation13], %s568
        // Predicated region
        $region73: #{tpu_custom_call.1} parent=47 // pred_check
          %p570 = pneg %p197
        $region74: #{tpu_custom_call.1} parent=47 // pred_check_branch
          %572 = sbr.rel (%p570) target = $region76
        $region75: #{tpu_custom_call.1} parent=47 // pred_region
          %s574 = ssub.s32 32, 32
          %575 = vsyncadd %s566, %s574
          %s576 = smul.addr %s27, 32
          %s577 = scalar_lea.hbm %s7, %s576
          %s579 = sshll.u32 %s569, 4
          %s580 = int_to_ptr.vmem [resolvable:$true] %s579
          %582 = dma.vmem_to_hbm [thread:$0]  %s580, 32, %s577, %s566
        $region76: #{tpu_custom_call.1} parent=47 // pred_fallthru
          _
      $region48: #{tpu_custom_call.1} parent=5 // pred_fallthru
        _
      %p583 = scmp.le.s32.totalorder 2, %s22
      // Predicated region
      $region77: #{tpu_custom_call.1} parent=5 // pred_check
        %p584 = pneg %p583
      $region78: #{tpu_custom_call.1} parent=5 // pred_check_branch
        %586 = sbr.rel (%p584) target = $region80
      $region79: #{tpu_custom_call.1} parent=5 // pred_region
        %s587 = ssub.s32 %s22, 2
        // Predicated region
        $region81: #{tpu_custom_call.1} parent=79 // pred_check
          %p588 = pneg %p203
        $region82: #{tpu_custom_call.1} parent=79 // pred_check_branch
          %590 = sbr.rel (%p588) target = $region84
        $region83: #{tpu_custom_call.1} parent=79 // pred_region
          %s591 = sand.u32 %s188, 1
          %s592 = scalar_lea.sflag [#allocation4], %s591
          %s593 = sand.u32 %s188, 1
          %s594 = smul.addr %s593, 2
          %s595 = scalar_lea.vmem [#allocation13], %s594
          %596 = dma.done %s592, 32
        $region84: #{tpu_custom_call.1} parent=79 // pred_fallthru
          _
      $region80: #{tpu_custom_call.1} parent=5 // pred_fallthru
        _
    $region6: #{tpu_custom_call.1} parent=1 // loop_footer
      %s26 = sadd.s32 1, %s22
    $region7: #{tpu_custom_call.1} parent=1 // loop_footer_branch
      %21 = sbr.rel target = $region3
    $region8: #{tpu_custom_call.1} parent=1 // loop_exit
      _
    %597 = vsyncpa [#allocation3], 1
    %s598 = scalar_lea.sflag [#allocation3], 1
    %599 = vsyncpa %s598, 1
    %600 = vsyncpa [#allocation4], 1
    %s601 = scalar_lea.sflag [#allocation4], 1
    %602 = vsyncpa %s601, 1
    %603 = vsyncpa [#allocation5], 1
    %s604 = scalar_lea.sflag [#allocation5], 1
    %605 = vsyncpa %s604, 1
    %606 = vsyncpa [#allocation8], 1
    %607 = vsyncpa [#allocation11], 1

</llo_original>
